<compile_context>
chip_gen: v5e
topology: v5e:2x2
jax: 0.10.0
libtpu: 0.0.40
codegen_flags: <defaults>
</compile_context>

<pallas_src>
import functools

import jax
import jax.numpy as jnp
from jax.experimental import pallas as pl
from jax.experimental.pallas import tpu as pltpu


_MAX_TILE_M = 2048   # max detection rows per block (both modes)


def _round_up(x, m):
    return ((x + m - 1) // m) * m


def _topk_rowreduce_kernel(x_ref, out_ref, acc_ref, *, k, tile_m, mode):
    """Sum over the first k rows of a per-row reduction, rows tiled on the grid.

    x_ref  : (tile_m, C) native-dtype VMEM block (rows [i*tile_m, (i+1)*tile_m))
    out_ref: (1, 1) f32 SMEM scalar output
    acc_ref: (1,)   f32 SMEM scratch accumulator (persists across grid steps)
    mode   : 'class' -> per-row max ;  'box' -> per-row sum of the first 4 cols
    """
    i = pl.program_id(0)

    @pl.when(i == 0)
    def _():
        acc_ref[0] = jnp.float32(0.0)

    vals = x_ref[...].astype(jnp.float32)                    # (tile_m, C)
    if mode == "class":
        per_row = jnp.max(vals, axis=1, keepdims=True)        # (tile_m, 1)
    else:  # 'box'
        per_row = jnp.sum(vals[:, :4], axis=1, keepdims=True)  # (tile_m, 1)

    if k % tile_m != 0:
        # Ragged tail: mask rows whose global index >= k.  Non-last blocks have
        # limit >= tile_m so they stay fully unmasked.  This also neutralizes
        # any out-of-bounds (padded) rows of the last block.
        limit = k - i * tile_m
        row_ids = jax.lax.broadcasted_iota(jnp.int32, (tile_m, 1), 0)
        per_row = jnp.where(row_ids < limit, per_row, 0.0)

    acc_ref[0] += jnp.sum(per_row)

    @pl.when(i == pl.num_programs(0) - 1)
    def _():
        out_ref[0, 0] = acc_ref[0]


def yolov8_target_forward(post_result, pre_post_boxes, *, ouput_type, conf, ratio):
    """JAX/Pallas equivalent of yolov8_target.forward((post_result, pre_post_boxes))."""
    del conf  # unused in the reference forward pass
    n = post_result.shape[0]
    k = int(n * ratio)

    # Mirror the PyTorch `elif`: 'all' only ever takes the class branch.
    if ouput_type in ("class", "all"):
        operand, mode = post_result, "class"
    elif ouput_type == "box":
        operand, mode = pre_post_boxes, "box"
    else:
        return jnp.zeros((), jnp.float32)   # no branch taken -> sum([]) == 0

    if k == 0:
        return jnp.zeros((), jnp.float32)

    c = operand.shape[1]
    tile_m = min(n, _MAX_TILE_M, _round_up(k, 8))   # mult of 8, or == n
    grid = (pl.cdiv(k, tile_m),)                    # only blocks holding rows < k
    kernel = functools.partial(_topk_rowreduce_kernel, k=k, tile_m=tile_m, mode=mode)

    out = pl.pallas_call(
        kernel,
        out_shape=jax.ShapeDtypeStruct((1, 1), jnp.float32),
        grid=grid,
        in_specs=[pl.BlockSpec((tile_m, c), lambda i: (i, 0))],
        out_specs=pl.BlockSpec((1, 1), lambda i: (0, 0),
                               memory_space=pltpu.SMEM),
        scratch_shapes=[pltpu.SMEM((1,), jnp.float32)],
        compiler_params=pltpu.CompilerParams(dimension_semantics=("arbitrary",)),
    )(operand)                      # the other input tensor is never touched
    return out[0, 0]


def _reference(post_result, pre_post_boxes, ouput_type, ratio):
    """Vectorized plain-JAX replica of the PyTorch loop (elif included)."""
    n = post_result.shape[0]
    k = int(n * ratio)
    if k == 0:
        return jnp.zeros((), jnp.float32)
    if ouput_type in ("class", "all"):
        return jnp.sum(jnp.max(post_result[:k].astype(jnp.float32), axis=1))
    if ouput_type == "box":
        return jnp.sum(pre_post_boxes[:k, :4].astype(jnp.float32))
    return jnp.zeros((), jnp.float32)


if __name__ == "__main__":
    key = jax.random.PRNGKey(0)
    k1, k2, k3, k4 = jax.random.split(key, 4)

    ok = True

    # --- small shapes: N=64 detections, C=16 class scores ---------------------
    N, C = 64, 16
    post_result = jax.random.normal(k1, (N, C), dtype=jnp.float32)
    pre_post_boxes = jax.random.normal(k2, (N, 4), dtype=jnp.float32)
    ratio, conf = 0.45, 0.25            # k = 28 -> ragged-tail masking path

    for ouput_type in ("class", "box", "all"):
        out = jax.block_until_ready(
            yolov8_target_forward(post_result, pre_post_boxes,
                                  ouput_type=ouput_type, conf=conf, ratio=ratio))
        ref = _reference(post_result, pre_post_boxes, ouput_type, ratio)
        if not jnp.allclose(out, ref, rtol=1e-5, atol=1e-4):
            ok = False

    # --- multi-block grid + ragged last block (class and box) -----------------
    N2, C2 = 2600, 80
    pr2 = jax.random.normal(k3, (N2, C2), dtype=jnp.float32)
    bb2 = jax.random.normal(k4, (N2, 4), dtype=jnp.float32)
    ratio2 = 0.87                        # k = 2262 -> 2 blocks of 2048 rows
    for ouput_type in ("class", "box"):
        out = jax.block_until_ready(
            yolov8_target_forward(pr2, bb2, ouput_type=ouput_type,
                                  conf=conf, ratio=ratio2))
        ref = _reference(pr2, bb2, ouput_type, ratio2)
        if not jnp.allclose(out, ref, rtol=1e-4, atol=1e-3):
            ok = False

    # --- native-dtype path: bf16 is DMA'd as bf16 and cast to f32 in-kernel ---
    pr_bf16 = post_result.astype(jnp.bfloat16)
    bb_bf16 = pre_post_boxes.astype(jnp.bfloat16)
    out_bf16 = jax.block_until_ready(
        yolov8_target_forward(pr_bf16, bb_bf16, ouput_type="class",
                              conf=conf, ratio=ratio))
    ref_bf16 = _reference(pr_bf16, bb_bf16, "class", ratio)
    if not jnp.allclose(out_bf16, ref_bf16, rtol=1e-3, atol=1e-3):
        ok = False

    # --- unknown output_type -> empty sum -> 0 --------------------------------
    out_none = jax.block_until_ready(
        yolov8_target_forward(post_result, pre_post_boxes,
                              ouput_type="none", conf=conf, ratio=ratio))
    if not jnp.allclose(out_none, 0.0):
        ok = False

    if ok:
        print("KERNEL_OK")
</pallas_src>

<mosaic_0001>
module attributes {stable_mosaic.version = 11 : i64} {
  func.func @_topk_rowreduce_kernel(%arg0: i32, %arg1: memref<32x16xf32, #tpu.memory_space<vmem>>, %arg2: memref<1x1xf32, #tpu.memory_space<smem>>, %arg3: memref<1xf32, #tpu.memory_space<smem>>) attributes {dimension_semantics = [#tpu.dimension_semantics<arbitrary>], iteration_bounds = array<i64: 1>, scalar_prefetch = 0 : i64, scratch_operands = 1 : i64, tpu.core_type = #tpu.core_type<tc>, window_params = [{transform_indices = @transform_0, window_bounds = array<i64: 32, 16>}, {transform_indices = @transform_1, window_bounds = array<i64: 1, 1>}]} {
    %c0_i32 = arith.constant 0 : i32
    %0 = arith.cmpi eq, %arg0, %c0_i32 : i32
    %1 = arith.extui %0 : i1 to i32
    %c0_i32_0 = arith.constant 0 : i32
    %2 = arith.cmpi ne, %1, %c0_i32_0 : i32
    scf.if %2 {
      %cst_8 = arith.constant 0.000000e+00 : f32
      %c0_9 = arith.constant 0 : index
      %23 = memref.load %arg3[%c0_9] : memref<1xf32, #tpu.memory_space<smem>>
      memref.store %cst_8, %arg3[%c0_9] : memref<1xf32, #tpu.memory_space<smem>>
    } else {
    }
    %c0 = arith.constant 0 : index
    %c0_1 = arith.constant 0 : index
    %3 = vector.load %arg1[%c0, %c0_1] : memref<32x16xf32, #tpu.memory_space<vmem>>, vector<32x16xf32>
    %cst = arith.constant dense<0xFF800000> : vector<32xf32>
    %4 = vector.multi_reduction <maximumf>, %3, %cst [1] : vector<32x16xf32> to vector<32xf32>
    %5 = vector.shape_cast %4 : vector<32xf32> to vector<32x1xf32>
    %c32_i32 = arith.constant 32 : i32
    %6 = arith.muli %arg0, %c32_i32 : i32
    %c28_i32 = arith.constant 28 : i32
    %7 = arith.subi %c28_i32, %6 : i32
    %8 = tpu.iota {dimensions = array<i32: 0>} : vector<32x1xi32>
    %9 = vector.broadcast %7 : i32 to vector<32x1xi32>
    %10 = arith.cmpi slt, %8, %9 : vector<32x1xi32>
    %cst_2 = arith.constant 0.000000e+00 : f32
    %11 = vector.broadcast %cst_2 : f32 to vector<32x1xf32>
    %12 = arith.select %10, %5, %11 : vector<32x1xi1>, vector<32x1xf32>
    %c0_3 = arith.constant 0 : index
    %13 = memref.load %arg3[%c0_3] : memref<1xf32, #tpu.memory_space<smem>>
    %14 = vector.shape_cast %12 : vector<32x1xf32> to vector<1x32x1xf32>
    %cst_4 = arith.constant dense<0.000000e+00> : vector<1xf32>
    %15 = vector.multi_reduction <add>, %14, %cst_4 [1, 2] : vector<1x32x1xf32> to vector<1xf32>
    %16 = vector.shape_cast %15 : vector<1xf32> to vector<1x1x1xf32>
    %17 = vector.extract %16[0, 0, 0] : f32 from vector<1x1x1xf32>
    %18 = arith.addf %13, %17 : f32
    %c0_5 = arith.constant 0 : index
    %19 = memref.load %arg3[%c0_5] : memref<1xf32, #tpu.memory_space<smem>>
    memref.store %18, %arg3[%c0_5] : memref<1xf32, #tpu.memory_space<smem>>
    %c0_i32_6 = arith.constant 0 : i32
    %20 = arith.cmpi eq, %arg0, %c0_i32_6 : i32
    %21 = arith.extui %20 : i1 to i32
    %c0_i32_7 = arith.constant 0 : i32
    %22 = arith.cmpi ne, %21, %c0_i32_7 : i32
    scf.if %22 {
      %c0_8 = arith.constant 0 : index
      %23 = memref.load %arg3[%c0_8] : memref<1xf32, #tpu.memory_space<smem>>
      %c0_9 = arith.constant 0 : index
      %c0_10 = arith.constant 0 : index
      %24 = memref.load %arg2[%c0_9, %c0_10] : memref<1x1xf32, #tpu.memory_space<smem>>
      memref.store %23, %arg2[%c0_9, %c0_10] : memref<1x1xf32, #tpu.memory_space<smem>>
    } else {
    }
    return
  }
  func.func @transform_0(%arg0: i32) -> (i32, i32) {
    %c0_i32 = arith.constant 0 : i32
    %c0_i32_0 = arith.constant 0 : i32
    return %arg0, %c0_i32 : i32, i32
  }
  func.func @transform_1(%arg0: i32) -> (i32, i32) {
    %c0_i32 = arith.constant 0 : i32
    %c0_i32_0 = arith.constant 0 : i32
    %c0_i32_1 = arith.constant 0 : i32
    return %c0_i32, %c0_i32_0 : i32, i32
  }
}

</mosaic_0001>

<llo_original>
// kernel: tpu_custom_call.1
$region0: #{tpu_custom_call.1}
  #allocation0 [shape = 'u32[]', space=smem, size = 0x4, offset = 0x4, fixed_abs, tag = 'smem constant byte address 0x4 - core index']
  #allocation1 [shape = 'u32[72,128]{1,0:T(1,128)}', space=vmem, size = 0x9000, scoped, tag = 'internal scratch']
  #allocation2 [shape = 'f32[1]{0:T(128)}', space=smem, size = 0x200, scoped, tag = 'scratch operand']
  %s0 = inlined_call_operand.vmem [shape: f32[64,16], index: 0, kind: input, shape index: {}]
  %s1 = inlined_call_operand.hbm [shape: f32[1,1], index: 1, kind: output, shape index: {}]
  %s2 = sld [smem:[#allocation0]]
  $region22: #{tpu_custom_call.1} parent=0
    _
  %s4 = ssub.s32 1, %s2
  %s5 = scalar_select 0, %s4, %s2
  $region1: #{tpu_custom_call.1} parent=0
    #allocation3 [shape = 'u8[512]{0}', space=smem, size = 0x200, scoped, tag = 'output window, operand 0, single buffered']
    #allocation4 [shape = 's32[1]{0}', space=sflag, size = 0x4, scoped, tag = 'scoped memory for tpu_custom_call.1']
    %6 = vsyncpa [#allocation4], 0
    // Predicated region
    $region2: #{tpu_custom_call.1} parent=1 // pred_check
      _
    $region3: #{tpu_custom_call.1} parent=1 // pred_check_branch
      %8 = sbr.rel (0) target = $region5
    $region4: #{tpu_custom_call.1} parent=1 // pred_region
      _
    $region5: #{tpu_custom_call.1} parent=1 // pred_fallthru
      _
    %p9 = scmp.eq.s32.totalorder 0, 0
    // Predicated region
    $region6: #{tpu_custom_call.1} parent=1 // pred_check
      %p10 = pneg %p9
    $region7: #{tpu_custom_call.1} parent=1 // pred_check_branch
      %12 = sbr.rel (%p10) target = $region9
    $region8: #{tpu_custom_call.1} parent=1 // pred_region
      %s13 = scalar_lea.smem [#allocation2], 0
      %14 = sst [smem:[%s13]] 0.0
    $region9: #{tpu_custom_call.1} parent=1 // pred_fallthru
      _
    %v15 = vld [vmem:[%s0] sm:$0xff]
    %v16 = vld [vmem:[%s0 + $0x8] sm:$0xff]
    %v17 = vld [vmem:[%s0 + $0x10] sm:$0xff]
    %v18 = vld [vmem:[%s0 + $0x18] sm:$0xff]
    %vm19 = vcmask 130048
    %v20 = vsel %vm19, %v15, -inf
    %21 = vmax.xlane.f32.xlu0 %v20
    %v22 = vpop.xlane.xlu0 %21
    %v23 = vsel %vm19, %v16, -inf
    %24 = vmax.xlane.f32.xlu0 %v23
    %v25 = vpop.xlane.xlu0 %24
    %v26 = vsel %vm19, %v17, -inf
    %27 = vmax.xlane.f32.xlu0 %v26
    %v28 = vpop.xlane.xlu0 %27
    %v29 = vsel %vm19, %v18, -inf
    %30 = vmax.xlane.f32.xlu0 %v29
    %v31 = vpop.xlane.xlu0 %30
    %s32 = smul.u32 0, 32
    %s33 = ssub.s32 28, %s32
    %v34 = vlaneseq
    %v35 = vshrl.u32 %v34, 7
    %v36 = vadd.s32 %v35, 8
    %v37 = vadd.s32 %v35, 16
    %v38 = vadd.s32 %v35, 24
    %v39 = vstv %s33
    %vm40 = vcmp.lt.s32.totalorder %v35, %v39
    %vm41 = vcmp.lt.s32.totalorder %v36, %v39
    %vm42 = vcmp.lt.s32.totalorder %v37, %v39
    %vm43 = vcmp.lt.s32.totalorder %v38, %v39
    %v44 = vsel %vm40, %v22, 0.0
    %v45 = vsel %vm41, %v25, 0.0
    %v46 = vsel %vm42, %v28, 0.0
    %v47 = vsel %vm43, %v31, 0.0
    %s48 = sld [smem:[#allocation2]]
    %vm49 = vcmask 7168
    %v50 = vsel %vm49, %v44, 0.0
    %v51 = vsel %vm49, %v45, 0.0
    %v52 = vadd.f32 %v50, %v51
    %v53 = vsel %vm49, %v46, 0.0
    %v54 = vadd.f32 %v52, %v53
    %v55 = vsel %vm49, %v47, 0.0
    %v56 = vadd.f32 %v54, %v55
    %57 = vadd.xlane.f32.xlu0 %v56
    %v58 = vpop.xlane.xlu0 %57
    %v59 = vrot.slane %v58, 4
    %v60 = vadd.f32 %v58, %v59
    %v61 = vrot.slane %v60, 2
    %v62 = vadd.f32 %v60, %v61
    %v63 = vrot.slane %v62, 1
    %v64 = vadd.f32 %v62, %v63
    %s65 = vtos %v64
    %s66 = sadd.f32 %s48, %s65
    %s67 = scalar_lea.smem [#allocation2], 0
    %68 = sst [smem:[%s67]] %s66
    // Predicated region
    $region10: #{tpu_custom_call.1} parent=1 // pred_check
      %p69 = pneg %p9
    $region11: #{tpu_custom_call.1} parent=1 // pred_check_branch
      %71 = sbr.rel (%p69) target = $region13
    $region12: #{tpu_custom_call.1} parent=1 // pred_region
      %s72 = sld [smem:[#allocation2]]
      %s73 = scalar_lea.smem [#allocation3], 0
      %74 = sst [smem:[%s73]] %s72
    $region13: #{tpu_custom_call.1} parent=1 // pred_fallthru
      _
    // Predicated region
    $region14: #{tpu_custom_call.1} parent=1 // pred_check
      _
    $region15: #{tpu_custom_call.1} parent=1 // pred_check_branch
      %76 = sbr.rel (0) target = $region17
    $region16: #{tpu_custom_call.1} parent=1 // pred_region
      %78 = vsyncadd [#allocation4], 0
      %s80 = sshll.u32 %s1, 4
      %s81 = int_to_ptr.hbm [resolvable:$true] %s80
      %83 = dma.smem_to_hbm [#allocation3], 16, %s81, [#allocation4]
    $region17: #{tpu_custom_call.1} parent=1 // pred_fallthru
      _
    // Predicated region
    $region18: #{tpu_custom_call.1} parent=1 // pred_check
      _
    $region19: #{tpu_custom_call.1} parent=1 // pred_check_branch
      %85 = sbr.rel (0) target = $region21
    $region20: #{tpu_custom_call.1} parent=1 // pred_region
      %87 = dma.done [#allocation4], 16
    $region21: #{tpu_custom_call.1} parent=1 // pred_fallthru
      _
    %88 = sfence
    %89 = vsyncpa [#allocation4], 1

</llo_original>
